<compile_context>
chip_gen: v7x
topology: tpu7x:2x2x1
jax: 0.10.0
libtpu: 0.0.40
codegen_flags: <defaults>
</compile_context>

<pallas_src>
import jax
import jax.numpy as jnp
from jax.experimental import pallas as pl
from jax.experimental.pallas import tpu as pltpu


def _copy_kernel(x_ref, o_ref):
    # Forward pass of DummyLayerNorm: return x unchanged (block copy).
    o_ref[...] = x_ref[...]


def _choose_block_rows(rows: int, E: int, itemsize: int) -> int:
    """Pick a sublane-aligned row-block size from a VMEM byte budget."""
    # Sublane packing multiple: 8 for 4-byte, 16 for 2-byte, 32 for 1-byte.
    pack = 8 * max(1, 4 // max(1, itemsize))

    # <=3 MiB per block -> 2 arrays x 2 pipeline buffers = <=12 MiB, which
    # fits v5e's 16 MiB scoped-VMEM default (v6e/v7x have more headroom).
    per_block_budget_bytes = 3 * 1024 * 1024
    budget_rows = per_block_budget_bytes // max(1, E * itemsize)
    budget_rows = max(pack, (budget_rows // pack) * pack)

    if rows <= 512:
        # Small input: one whole-array block (block == full array dims, so no
        # (8,128) divisibility requirement applies).
        return rows

    # Larger inputs: at least 2 grid steps (lets v7x shard rows across its
    # two TensorCores), capped by the VMEM budget, sublane-aligned.
    half_rows = ((pl.cdiv(rows, 2) + pack - 1) // pack) * pack
    return max(pack, min(budget_rows, half_rows))


def dummy_layernorm_forward(
    x: jax.Array,
    *,
    use_pallas_kernel: bool = False,
    donate_input: bool = False,
) -> jax.Array:
    """Identity forward of DummyLayerNorm.

    Default path returns `x` directly (fastest possible identity). With
    `use_pallas_kernel=True` the copy is done by a Pallas kernel. Set
    `donate_input=True` ONLY when the caller actually donates x (e.g. via
    jax.jit(..., donate_argnums)); otherwise XLA inserts a defensive copy and
    the aliasing becomes a net loss. Donated inputs are consumed.
    """
    if not use_pallas_kernel:
        # Identity: no kernel launch, no HBM traffic.
        return x

    orig_shape = x.shape
    E = orig_shape[-1]
    rows = 1
    for d in orig_shape[:-1]:
        rows *= int(d)
    x2d = x.reshape(rows, E)  # metadata-only; E stays lane-dense on the last axis

    itemsize = jnp.dtype(x.dtype).itemsize
    block_rows = _choose_block_rows(rows, E, itemsize)
    grid = (pl.cdiv(rows, block_rows),)

    extra_kwargs = {}
    if donate_input:
        # Reuse the input HBM buffer for the output (only a win when the
        # caller really donates x; see docstring).
        extra_kwargs["input_output_aliases"] = {0: 0}

    out2d = pl.pallas_call(
        _copy_kernel,
        out_shape=jax.ShapeDtypeStruct((rows, E), x.dtype),
        grid_spec=pltpu.PrefetchScalarGridSpec(
            num_scalar_prefetch=0,
            grid=grid,
            in_specs=[pl.BlockSpec((block_rows, E), lambda i: (i, 0))],
            out_specs=pl.BlockSpec((block_rows, E), lambda i: (i, 0)),
        ),
        # Pure memory traffic, zero compute: help XLA schedule around it.
        cost_estimate=pl.CostEstimate(
            flops=0,
            transcendentals=0,
            bytes_accessed=2 * rows * E * itemsize,
        ),
        compiler_params=pltpu.CompilerParams(
            dimension_semantics=("parallel",),
        ),
        **extra_kwargs,
    )(x2d)

    return out2d.reshape(orig_shape)


class DummyLayerNormPallas:
    """Pallas equivalent of DummyLayerNorm: identity forward, no parameters."""

    def __init__(self, normalized_shape, eps=1e-05,
                 use_pallas_kernel=False, donate_input=False):
        # Matches the PyTorch __init__: normalized_shape / eps are unused.
        self.normalized_shape = normalized_shape
        self.eps = eps
        self.use_pallas_kernel = use_pallas_kernel
        self.donate_input = donate_input

    def __call__(self, x):
        return dummy_layernorm_forward(
            x,
            use_pallas_kernel=self.use_pallas_kernel,
            donate_input=self.donate_input,
        )


if __name__ == "__main__":
    key = jax.random.PRNGKey(0)

    # Shape from the reference script: x = torch.rand(2, 4, 768)
    x = jax.random.uniform(key, (2, 4, 768), dtype=jnp.float32)

    # Default (recommended) path: pure identity, no kernel launch.
    layer = DummyLayerNormPallas(normalized_shape=768)
    y_fast = jax.block_until_ready(layer(x))
    assert y_fast.shape == x.shape and y_fast.dtype == x.dtype
    assert bool(jnp.array_equal(y_fast, x))

    # Pallas kernel path, small input (single whole-array block, grid=(1,)).
    y_kernel = jax.block_until_ready(
        dummy_layernorm_forward(x, use_pallas_kernel=True)
    )
    assert y_kernel.shape == x.shape and y_kernel.dtype == x.dtype
    assert bool(jnp.array_equal(y_kernel, x))

    # Pallas kernel path, larger input: exercises the budget-derived tiled
    # path (rows=4096, E=768 f32 -> 1024-row blocks, 4 grid steps).
    key2 = jax.random.PRNGKey(0)
    x_big = jax.random.uniform(key2, (8, 512, 768), dtype=jnp.float32)
    y_big = jax.block_until_ready(
        dummy_layernorm_forward(x_big, use_pallas_kernel=True)
    )
    assert y_big.shape == x_big.shape and y_big.dtype == x_big.dtype
    assert bool(jnp.array_equal(y_big, x_big))

    print("KERNEL_OK")
</pallas_src>

<mosaic_0001>
module attributes {stable_mosaic.version = 11 : i64} {
  func.func @_copy_kernel(%arg0: i32, %arg1: memref<8x768xf32, #tpu.memory_space<vmem>>, %arg2: memref<8x768xf32, #tpu.memory_space<vmem>>) attributes {dimension_semantics = [#tpu.dimension_semantics<parallel>], iteration_bounds = array<i64: 1>, scalar_prefetch = 0 : i64, scratch_operands = 0 : i64, tpu.core_type = #tpu.core_type<tc>, window_params = [{transform_indices = @transform_0, window_bounds = array<i64: 8, 768>}, {transform_indices = @transform_1, window_bounds = array<i64: 8, 768>}]} {
    %c0 = arith.constant 0 : index
    %c0_0 = arith.constant 0 : index
    %0 = vector.load %arg1[%c0, %c0_0] : memref<8x768xf32, #tpu.memory_space<vmem>>, vector<8x768xf32>
    %c0_1 = arith.constant 0 : index
    %c0_2 = arith.constant 0 : index
    %1 = vector.load %arg2[%c0_1, %c0_2] : memref<8x768xf32, #tpu.memory_space<vmem>>, vector<8x768xf32>
    tpu.vector_store %arg2[%c0_1, %c0_2], %0 {strides = array<i32>} : memref<8x768xf32, #tpu.memory_space<vmem>>, vector<8x768xf32>,
    return
  }
  func.func @transform_0(%arg0: i32) -> (i32, i32) {
    %c0_i32 = arith.constant 0 : i32
    %c0_i32_0 = arith.constant 0 : i32
    return %arg0, %c0_i32 : i32, i32
  }
  func.func @transform_1(%arg0: i32) -> (i32, i32) {
    %c0_i32 = arith.constant 0 : i32
    %c0_i32_0 = arith.constant 0 : i32
    return %arg0, %c0_i32 : i32, i32
  }
}

</mosaic_0001>

<llo_original>
// kernel: tpu_custom_call.1
$region0: #{tpu_custom_call.1}
  #allocation0 [shape = 'u32[]', space=smem, size = 0x4, offset = 0x4, fixed_abs, tag = 'smem constant byte address 0x4 - core index']
  #allocation1 [shape = 'u32[144,128]{1,0:T(1,128)}', space=vmem, size = 0x12000, scoped, tag = 'internal scratch']
  %s0 = inlined_call_operand.hbm [shape: f32[8,768], index: 0, kind: input, shape index: {}]
  %s1 = inlined_call_operand.hbm [shape: f32[8,768], index: 1, kind: output, shape index: {}]
  %s2 = sld [smem:[#allocation0]]
  $region18: #{tpu_custom_call.1} parent=0
    _
  %s4 = ssub.s32 1, %s2
  %s5 = scalar_select 0, %s4, %s2
  $region1: #{tpu_custom_call.1} parent=0
    #allocation2 [shape = 'u8[24576]{0}', space=vmem, size = 0x6000, scoped, tag = 'input window, operand 0, single buffered']
    #allocation3 [shape = 's32[1]{0}', space=sflag, size = 0x4, scoped, tag = 'scoped memory for tpu_custom_call.1']
    #allocation4 [shape = 's32[1]{0}', space=sflag, size = 0x4, scoped, tag = 'scoped memory for tpu_custom_call.1']
    #allocation5 [shape = 'u8[24576]{0}', space=vmem, size = 0x6000, scoped, tag = 'output window, operand 0, single buffered']
    %6 = vsyncpa [#allocation3], 0
    %7 = vsyncpa [#allocation4], 0
    // Predicated region
    $region2: #{tpu_custom_call.1} parent=1 // pred_check
      _
    $region3: #{tpu_custom_call.1} parent=1 // pred_check_branch
      %9 = sbr.rel (0) target = $region5
    $region4: #{tpu_custom_call.1} parent=1 // pred_region
      %s11 = ssub.s32 768, 768
      %12 = vsyncadd [#allocation3], %s11
      %s14 = sshll.u32 [#allocation2], 4
      %s15 = int_to_ptr.vmem [resolvable:$true] %s14
      %17 = dma.hbm_to_vmem [thread:$0]  %s0, 768, %s15, [#allocation3]
    $region5: #{tpu_custom_call.1} parent=1 // pred_fallthru
      _
    // Predicated region
    $region6: #{tpu_custom_call.1} parent=1 // pred_check
      _
    $region7: #{tpu_custom_call.1} parent=1 // pred_check_branch
      %19 = sbr.rel (0) target = $region9
    $region8: #{tpu_custom_call.1} parent=1 // pred_region
      %20 = dma.done [#allocation3], 768
    $region9: #{tpu_custom_call.1} parent=1 // pred_fallthru
      _
    %v21 = vld [vmem:[#allocation2] sm:$0xff]
    %v22 = vld [vmem:[#allocation2 + $0x8] sm:$0xff]
    %v23 = vld [vmem:[#allocation2 + $0x10] sm:$0xff]
    %v24 = vld [vmem:[#allocation2 + $0x18] sm:$0xff]
    %v25 = vld [vmem:[#allocation2 + $0x20] sm:$0xff]
    %v26 = vld [vmem:[#allocation2 + $0x28] sm:$0xff]
    %27 = vst [vmem:[#allocation5] sm:$0xff] %v21
    %28 = vst [vmem:[#allocation5 + $0x8] sm:$0xff] %v22
    %29 = vst [vmem:[#allocation5 + $0x10] sm:$0xff] %v23
    %30 = vst [vmem:[#allocation5 + $0x18] sm:$0xff] %v24
    %31 = vst [vmem:[#allocation5 + $0x20] sm:$0xff] %v25
    %32 = vst [vmem:[#allocation5 + $0x28] sm:$0xff] %v26
    // Predicated region
    $region10: #{tpu_custom_call.1} parent=1 // pred_check
      _
    $region11: #{tpu_custom_call.1} parent=1 // pred_check_branch
      %34 = sbr.rel (0) target = $region13
    $region12: #{tpu_custom_call.1} parent=1 // pred_region
      %s36 = ssub.s32 768, 768
      %37 = vsyncadd [#allocation4], %s36
      %s39 = sshll.u32 [#allocation5], 4
      %s40 = int_to_ptr.vmem [resolvable:$true] %s39
      %42 = dma.vmem_to_hbm [thread:$0]  %s40, 768, %s1, [#allocation4]
    $region13: #{tpu_custom_call.1} parent=1 // pred_fallthru
      _
    // Predicated region
    $region14: #{tpu_custom_call.1} parent=1 // pred_check
      _
    $region15: #{tpu_custom_call.1} parent=1 // pred_check_branch
      %44 = sbr.rel (0) target = $region17
    $region16: #{tpu_custom_call.1} parent=1 // pred_region
      %45 = dma.done [#allocation4], 768
    $region17: #{tpu_custom_call.1} parent=1 // pred_fallthru
      _
    %46 = vsyncpa [#allocation3], 1
    %47 = vsyncpa [#allocation4], 1

</llo_original>
